<compile_context>
chip_gen: v5e
topology: v5e:2x2
jax: 0.10.0
libtpu: 0.0.40
codegen_flags: <defaults>
</compile_context>

<pallas_src>
import functools

import jax
import jax.numpy as jnp
from jax.experimental import pallas as pl
from jax.experimental.pallas import tpu as pltpu


def _round_up(x, m):
    return ((x + m - 1) // m) * m


def _rmse_basin_kernel(out_ref, tgt_ref, sqrtm_ref, valid_ref, *, tile_t, n_rows):
    """Grid = (gage_tiles [parallel], time_tiles [arbitrary]).

    sqrtm_ref / valid_ref double as per-gage accumulators:
      during the T sweep : sqrtm_ref <- sum of squared errors, valid_ref <- B
      at the last T step : converted in place to sqrt(MSE) and valid mask.
    """
    t = pl.program_id(1)

    @pl.when(t == 0)
    def _init():
        sqrtm_ref[...] = jnp.zeros_like(sqrtm_ref)
        valid_ref[...] = jnp.zeros_like(valid_ref)

    tgt = tgt_ref[...].astype(jnp.float32)   # [tile_t, tile_n]
    out = out_ref[...].astype(jnp.float32)

    ok = jnp.logical_not(jnp.isnan(tgt))
    if n_rows % tile_t != 0:
        # Mask padded rows of the partial last T block.
        row = jax.lax.broadcasted_iota(jnp.int32, tgt.shape, 0) + t * tile_t
        ok = jnp.logical_and(ok, row < n_rows)

    # Fused mask: one where() on the difference (matches torch's zero-both).
    diff = jnp.where(ok, tgt - out, 0.0)
    valid_ref[...] += jnp.sum(jnp.where(ok, 1.0, 0.0), axis=0, keepdims=True)
    sqrtm_ref[...] += jnp.sum(diff * diff, axis=0, keepdims=True)

    @pl.when(t == pl.num_programs(1) - 1)
    def _finalize():
        B = valid_ref[...]
        vsum = sqrtm_ref[...]
        has = B != 0.0
        m = jnp.where(has, vsum / jnp.where(has, B, 1.0), 0.0)
        m = jnp.where(jnp.isnan(m), 0.0, m)          # torch: m[isnan(m)] = 0
        sqrtm_ref[...] = jnp.where(has, jnp.sqrt(m), 0.0)
        valid_ref[...] = has.astype(jnp.float32)


def rmse_basin_loss(output, target, *, tile_t_max=512, tile_n_max=1024):
    """Pallas implementation of RMSEbasinLosstest.forward.

    output, target: arrays of shape [T, Ngage] (f32 or bf16).
    Returns: scalar float32 loss.
    """
    assert output.shape == target.shape and target.ndim == 2
    T, N = target.shape

    # --- gage (lane) dim: pad with NaN targets to a 128-multiple tile so every
    # block contains only real-or-NaN data (padded gages land in the B == 0
    # branch and are excluded from the mean automatically).
    tile_n = min(tile_n_max, _round_up(N, 128))
    n_pad = _round_up(N, tile_n)
    if n_pad != N:
        pw = ((0, 0), (0, n_pad - N))
        target = jnp.pad(target, pw, constant_values=jnp.nan)
        output = jnp.pad(output, pw, constant_values=0)

    # --- time tiles: full dim if small (always legal block shape), otherwise
    # 512-row blocks; partial last block is handled by the in-kernel row mask.
    tile_t = T if T <= tile_t_max else tile_t_max
    grid = (n_pad // tile_n, pl.cdiv(T, tile_t))

    kernel = functools.partial(_rmse_basin_kernel, tile_t=tile_t, n_rows=T)

    sqrt_m, valid = pl.pallas_call(
        kernel,
        out_shape=(
            jax.ShapeDtypeStruct((1, n_pad), jnp.float32),
            jax.ShapeDtypeStruct((1, n_pad), jnp.float32),
        ),
        grid_spec=pltpu.PrefetchScalarGridSpec(
            num_scalar_prefetch=0,
            grid=grid,
            in_specs=[
                pl.BlockSpec((tile_t, tile_n), lambda g, t: (t, g)),
                pl.BlockSpec((tile_t, tile_n), lambda g, t: (t, g)),
            ],
            out_specs=[
                pl.BlockSpec((1, tile_n), lambda g, t: (0, g)),
                pl.BlockSpec((1, tile_n), lambda g, t: (0, g)),
            ],
        ),
        compiler_params=pltpu.CompilerParams(
            dimension_semantics=("parallel", "arbitrary"),
            vmem_limit_bytes=32 * 1024 * 1024,
        ),
    )(output, target)

    # Tiny epilogue on (1, n_pad) arrays: masked mean + all-NaN branch.
    n_valid = jnp.sum(valid)
    loss_valid = jnp.sum(sqrt_m) / jnp.maximum(n_valid, 1.0)
    return jnp.where(n_valid == 0.0, jnp.float32(1.0), loss_valid)


def _reference(output, target):
    """Pure-JAX reference mirroring the PyTorch code."""
    is_nan = jnp.isnan(target)
    B = jnp.sum(jnp.where(is_nan, 0.0, 1.0), axis=0)
    t2 = jnp.where(is_nan, 0.0, target)
    o2 = jnp.where(is_nan, 0.0, output)
    v = (t2 - o2) ** 2
    vsum = jnp.sum(v, axis=0)
    valid = B != 0.0
    n_valid = jnp.sum(valid.astype(jnp.float32))
    m = jnp.where(valid, vsum / jnp.where(valid, B, 1.0), 0.0)
    m = jnp.where(jnp.isnan(m), 0.0, m)
    loss_valid = jnp.sum(jnp.where(valid, jnp.sqrt(m), 0.0)) / jnp.maximum(n_valid, 1.0)
    return jnp.where(n_valid == 0.0, jnp.float32(1.0), loss_valid)


if __name__ == "__main__":
    # Small shapes chosen to exercise: multiple T tiles, a partial last T tile
    # (600 = 2*256 + 88), gage padding (200 -> 256), fully-NaN gages, and NaNs
    # in `output` at valid target positions.
    T, NGAGE = 600, 200

    key = jax.random.PRNGKey(0)
    k_out, k_tgt, k_mask = jax.random.split(key, 3)

    output = jax.random.normal(k_out, (T, NGAGE), dtype=jnp.float32)
    target = jax.random.normal(k_tgt, (T, NGAGE), dtype=jnp.float32)

    nan_mask = jax.random.uniform(k_mask, (T, NGAGE)) < 0.3
    nan_mask = nan_mask.at[:, :4].set(True)          # gages 0..3 entirely NaN
    target = jnp.where(nan_mask, jnp.nan, target)
    output = output.at[5, 10].set(jnp.nan)           # NaN prediction path

    loss = rmse_basin_loss(output, target, tile_t_max=256)
    jax.block_until_ready(loss)
    ref = _reference(output, target)
    assert jnp.allclose(loss, ref, rtol=1e-5, atol=1e-6), (loss, ref)

    # All-NaN branch: torch returns exactly 1.0.
    target_all_nan = jnp.full((T, NGAGE), jnp.nan, dtype=jnp.float32)
    loss_all = rmse_basin_loss(output, target_all_nan, tile_t_max=256)
    jax.block_until_ready(loss_all)
    assert jnp.allclose(loss_all, 1.0), loss_all

    print("KERNEL_OK")
</pallas_src>

<mosaic_0001>
module attributes {stable_mosaic.version = 11 : i64} {
  func.func @_rmse_basin_kernel(%arg0: i32, %arg1: i32, %arg2: memref<256x256xf32, #tpu.memory_space<vmem>>, %arg3: memref<256x256xf32, #tpu.memory_space<vmem>>, %arg4: memref<1x256xf32, #tpu.memory_space<vmem>>, %arg5: memref<1x256xf32, #tpu.memory_space<vmem>>) attributes {dimension_semantics = [#tpu.dimension_semantics<parallel>, #tpu.dimension_semantics<arbitrary>], iteration_bounds = array<i64: 1, 3>, scalar_prefetch = 0 : i64, scratch_operands = 0 : i64, tpu.core_type = #tpu.core_type<tc>, window_params = [{transform_indices = @transform_0, window_bounds = array<i64: 256, 256>}, {transform_indices = @transform_1, window_bounds = array<i64: 256, 256>}, {transform_indices = @transform_2, window_bounds = array<i64: 1, 256>}, {transform_indices = @transform_3, window_bounds = array<i64: 1, 256>}]} {
    %c0_i32 = arith.constant 0 : i32
    %0 = arith.cmpi eq, %arg1, %c0_i32 : i32
    %1 = arith.extui %0 : i1 to i32
    %c0_i32_0 = arith.constant 0 : i32
    %2 = arith.cmpi ne, %1, %c0_i32_0 : i32
    scf.if %2 {
      %cst_18 = arith.constant 0.000000e+00 : f32
      %34 = vector.broadcast %cst_18 : f32 to vector<1x256xf32>
      %c0_19 = arith.constant 0 : index
      %c0_20 = arith.constant 0 : index
      %35 = vector.load %arg4[%c0_19, %c0_20] : memref<1x256xf32, #tpu.memory_space<vmem>>, vector<1x256xf32>
      tpu.vector_store %arg4[%c0_19, %c0_20], %34 {strides = array<i32>} : memref<1x256xf32, #tpu.memory_space<vmem>>, vector<1x256xf32>,
      %cst_21 = arith.constant 0.000000e+00 : f32
      %36 = vector.broadcast %cst_21 : f32 to vector<1x256xf32>
      %c0_22 = arith.constant 0 : index
      %c0_23 = arith.constant 0 : index
      %37 = vector.load %arg5[%c0_22, %c0_23] : memref<1x256xf32, #tpu.memory_space<vmem>>, vector<1x256xf32>
      tpu.vector_store %arg5[%c0_22, %c0_23], %36 {strides = array<i32>} : memref<1x256xf32, #tpu.memory_space<vmem>>, vector<1x256xf32>,
    } else {
    }
    %c0 = arith.constant 0 : index
    %c0_1 = arith.constant 0 : index
    %3 = vector.load %arg3[%c0, %c0_1] : memref<256x256xf32, #tpu.memory_space<vmem>>, vector<256x256xf32>
    %c0_2 = arith.constant 0 : index
    %c0_3 = arith.constant 0 : index
    %4 = vector.load %arg2[%c0_2, %c0_3] : memref<256x256xf32, #tpu.memory_space<vmem>>, vector<256x256xf32>
    %5 = arith.cmpf one, %3, %3 : vector<256x256xf32>
    %cst = arith.constant dense<true> : vector<256x256xi1>
    %6 = arith.xori %5, %cst : vector<256x256xi1>
    %7 = tpu.iota {dimensions = array<i32: 0>} : vector<256x256xi32>
    %c256_i32 = arith.constant 256 : i32
    %8 = arith.muli %arg1, %c256_i32 : i32
    %9 = vector.broadcast %8 : i32 to vector<256x256xi32>
    %10 = arith.addi %7, %9 : vector<256x256xi32>
    %c600_i32 = arith.constant 600 : i32
    %11 = vector.broadcast %c600_i32 : i32 to vector<256x256xi32>
    %12 = arith.cmpi slt, %10, %11 : vector<256x256xi32>
    %13 = arith.andi %6, %12 : vector<256x256xi1>
    %14 = arith.subf %3, %4 : vector<256x256xf32>
    %cst_4 = arith.constant 0.000000e+00 : f32
    %15 = vector.broadcast %cst_4 : f32 to vector<256x256xf32>
    %16 = arith.select %13, %14, %15 : vector<256x256xi1>, vector<256x256xf32>
    %c0_5 = arith.constant 0 : index
    %c0_6 = arith.constant 0 : index
    %17 = vector.load %arg5[%c0_5, %c0_6] : memref<1x256xf32, #tpu.memory_space<vmem>>, vector<1x256xf32>
    %cst_7 = arith.constant 1.000000e+00 : f32
    %cst_8 = arith.constant 0.000000e+00 : f32
    %18 = vector.broadcast %cst_7 : f32 to vector<256x256xf32>
    %19 = vector.broadcast %cst_8 : f32 to vector<256x256xf32>
    %20 = arith.select %13, %18, %19 : vector<256x256xi1>, vector<256x256xf32>
    %cst_9 = arith.constant dense<0.000000e+00> : vector<256xf32>
    %21 = vector.multi_reduction <add>, %20, %cst_9 [0] : vector<256x256xf32> to vector<256xf32>
    %22 = vector.shape_cast %21 : vector<256xf32> to vector<1x256xf32>
    %23 = arith.addf %17, %22 : vector<1x256xf32>
    %c0_10 = arith.constant 0 : index
    %c0_11 = arith.constant 0 : index
    %24 = vector.load %arg5[%c0_10, %c0_11] : memref<1x256xf32, #tpu.memory_space<vmem>>, vector<1x256xf32>
    tpu.vector_store %arg5[%c0_10, %c0_11], %23 {strides = array<i32>} : memref<1x256xf32, #tpu.memory_space<vmem>>, vector<1x256xf32>,
    %c0_12 = arith.constant 0 : index
    %c0_13 = arith.constant 0 : index
    %25 = vector.load %arg4[%c0_12, %c0_13] : memref<1x256xf32, #tpu.memory_space<vmem>>, vector<1x256xf32>
    %26 = arith.mulf %16, %16 : vector<256x256xf32>
    %cst_14 = arith.constant dense<0.000000e+00> : vector<256xf32>
    %27 = vector.multi_reduction <add>, %26, %cst_14 [0] : vector<256x256xf32> to vector<256xf32>
    %28 = vector.shape_cast %27 : vector<256xf32> to vector<1x256xf32>
    %29 = arith.addf %25, %28 : vector<1x256xf32>
    %c0_15 = arith.constant 0 : index
    %c0_16 = arith.constant 0 : index
    %30 = vector.load %arg4[%c0_15, %c0_16] : memref<1x256xf32, #tpu.memory_space<vmem>>, vector<1x256xf32>
    tpu.vector_store %arg4[%c0_15, %c0_16], %29 {strides = array<i32>} : memref<1x256xf32, #tpu.memory_space<vmem>>, vector<1x256xf32>,
    %c2_i32 = arith.constant 2 : i32
    %31 = arith.cmpi eq, %arg1, %c2_i32 : i32
    %32 = arith.extui %31 : i1 to i32
    %c0_i32_17 = arith.constant 0 : i32
    %33 = arith.cmpi ne, %32, %c0_i32_17 : i32
    scf.if %33 {
      %c0_18 = arith.constant 0 : index
      %c0_19 = arith.constant 0 : index
      %34 = vector.load %arg5[%c0_18, %c0_19] : memref<1x256xf32, #tpu.memory_space<vmem>>, vector<1x256xf32>
      %c0_20 = arith.constant 0 : index
      %c0_21 = arith.constant 0 : index
      %35 = vector.load %arg4[%c0_20, %c0_21] : memref<1x256xf32, #tpu.memory_space<vmem>>, vector<1x256xf32>
      %cst_22 = arith.constant 0.000000e+00 : f32
      %36 = vector.broadcast %cst_22 : f32 to vector<1x256xf32>
      %37 = arith.cmpf one, %34, %36 : vector<1x256xf32>
      %cst_23 = arith.constant 1.000000e+00 : f32
      %38 = vector.broadcast %cst_23 : f32 to vector<1x256xf32>
      %39 = arith.select %37, %34, %38 : vector<1x256xi1>, vector<1x256xf32>
      %40 = arith.divf %35, %39 : vector<1x256xf32>
      %cst_24 = arith.constant 0.000000e+00 : f32
      %41 = vector.broadcast %cst_24 : f32 to vector<1x256xf32>
      %42 = arith.select %37, %40, %41 : vector<1x256xi1>, vector<1x256xf32>
      %43 = arith.cmpf one, %42, %42 : vector<1x256xf32>
      %cst_25 = arith.constant 0.000000e+00 : f32
      %44 = vector.broadcast %cst_25 : f32 to vector<1x256xf32>
      %45 = arith.select %43, %44, %42 : vector<1x256xi1>, vector<1x256xf32>
      %46 = math.sqrt %45 : vector<1x256xf32>
      %cst_26 = arith.constant 0.000000e+00 : f32
      %47 = vector.broadcast %cst_26 : f32 to vector<1x256xf32>
      %48 = arith.select %37, %46, %47 : vector<1x256xi1>, vector<1x256xf32>
      %c0_27 = arith.constant 0 : index
      %c0_28 = arith.constant 0 : index
      %49 = vector.load %arg4[%c0_27, %c0_28] : memref<1x256xf32, #tpu.memory_space<vmem>>, vector<1x256xf32>
      tpu.vector_store %arg4[%c0_27, %c0_28], %48 {strides = array<i32>} : memref<1x256xf32, #tpu.memory_space<vmem>>, vector<1x256xf32>,
      %50 = arith.extui %37 : vector<1x256xi1> to vector<1x256xi32>
      %51 = arith.sitofp %50 : vector<1x256xi32> to vector<1x256xf32>
      %c0_29 = arith.constant 0 : index
      %c0_30 = arith.constant 0 : index
      %52 = vector.load %arg5[%c0_29, %c0_30] : memref<1x256xf32, #tpu.memory_space<vmem>>, vector<1x256xf32>
      tpu.vector_store %arg5[%c0_29, %c0_30], %51 {strides = array<i32>} : memref<1x256xf32, #tpu.memory_space<vmem>>, vector<1x256xf32>,
    } else {
    }
    return
  }
  func.func @transform_0(%arg0: i32, %arg1: i32) -> (i32, i32) {
    %c0_i32 = arith.constant 0 : i32
    return %arg1, %arg0 : i32, i32
  }
  func.func @transform_1(%arg0: i32, %arg1: i32) -> (i32, i32) {
    %c0_i32 = arith.constant 0 : i32
    return %arg1, %arg0 : i32, i32
  }
  func.func @transform_2(%arg0: i32, %arg1: i32) -> (i32, i32) {
    %c0_i32 = arith.constant 0 : i32
    %c0_i32_0 = arith.constant 0 : i32
    return %c0_i32, %arg0 : i32, i32
  }
  func.func @transform_3(%arg0: i32, %arg1: i32) -> (i32, i32) {
    %c0_i32 = arith.constant 0 : i32
    %c0_i32_0 = arith.constant 0 : i32
    return %c0_i32, %arg0 : i32, i32
  }
}

</mosaic_0001>

<llo_original>
// kernel: tpu_custom_call.1
$region0: #{tpu_custom_call.1}
  #allocation0 [shape = 'u32[]', space=smem, size = 0x4, offset = 0x4, fixed_abs, tag = 'smem constant byte address 0x4 - core index']
  #allocation1 [shape = 'u32[72,128]{1,0:T(1,128)}', space=vmem, size = 0x9000, scoped, tag = 'internal scratch']
  %s0 = inlined_call_operand.hbm [shape: f32[600,256], index: 0, kind: input, shape index: {}]
  %s1 = inlined_call_operand.hbm [shape: f32[600,256], index: 1, kind: input, shape index: {}]
  %s2 = inlined_call_operand.hbm [shape: f32[1,256], index: 2, kind: output, shape index: {0}]
  %s3 = inlined_call_operand.hbm [shape: f32[1,256], index: 3, kind: output, shape index: {1}]
  %4 = xla_tuple %s2, %s3
  %s5 = sld [smem:[#allocation0]]
  $region65: #{tpu_custom_call.1} parent=0
    _
  %s7 = ssub.s32 1, %s5
  %s8 = scalar_select 0, %s7, %s5
  $region1: #{tpu_custom_call.1} parent=0
    #allocation2 [shape = 'u8[524288]{0}', space=vmem, size = 0x80000, scoped, tag = 'input window, operand 0']
    #allocation3 [shape = 's32[2]{0}', space=sflag, size = 0x8, scoped, tag = 'scoped memory for tpu_custom_call.1']
    #allocation4 [shape = 's32[2]{0}', space=sflag, size = 0x8, scoped, tag = 'scoped memory for tpu_custom_call.1']
    #allocation5 [shape = 'u8[524288]{0}', space=vmem, size = 0x80000, scoped, tag = 'input window, operand 1']
    #allocation6 [shape = 's32[2]{0}', space=sflag, size = 0x8, scoped, tag = 'scoped memory for tpu_custom_call.1']
    #allocation7 [shape = 'u8[1024]{0}', space=vmem, size = 0x400, scoped, tag = 'output window, operand 0, single buffered']
    #allocation8 [shape = 'u8[1024]{0}', space=vmem, size = 0x400, scoped, tag = 'output window, operand 1, single buffered']
    #allocation9 [shape = 's32[1]{0}', space=sflag, size = 0x4, scoped, tag = 'scoped memory for tpu_custom_call.1']
    %9 = vsyncpa [#allocation3], 0
    %s10 = scalar_lea.sflag [#allocation3], 1
    %11 = vsyncpa %s10, 0
    %12 = vsyncpa [#allocation6], 0
    %s13 = scalar_lea.sflag [#allocation6], 1
    %14 = vsyncpa %s13, 0
    %15 = vsyncpa [#allocation4], 0
    %16 = vsyncpa [#allocation9], 0
    loop: start=0, step=1, limit=5
    $region2: #{tpu_custom_call.1} parent=1 // loop_pre_header
      _
    $region3: #{tpu_custom_call.1} parent=1 // loop_header
      %s18 = sphi 0, %s22
      %p19 = scmp.ge.s32.totalorder %s18, 5
      %s25 = sphi 0, %s37
      %s26 = sphi 0, %s33
      %s27 = sphi 0, %s25
      %s28 = sphi 0, %s26
      %s29 = sphi 0, %s27
      %s30 = sphi 0, %s28
      %s42 = sphi 0, %s44
      %s45 = sphi 0, %s42
      %s46 = sphi 0, %s45
      %s62 = sphi 0, %s46
      %s70 = sphi 0, %s72
      %s73 = sphi 0, %s70
      %s74 = sphi 0, %s73
      %s90 = sphi 0, %s74
      %s96 = sphi 0, %s98
      %s99 = sphi 0, %s96
      %s100 = sphi 0, %s99
      %s116 = sphi 0, %s100
      %s122 = sphi 0, %s124
      %s125 = sphi 0, %s122
      %s126 = sphi 0, %s125
      %s142 = sphi 0, %s126
    $region4: #{tpu_custom_call.1} parent=1 // loop_header_branch
      %21 = sbr.rel (%p19) target = $region8
    $region5: #{tpu_custom_call.1} parent=1 // loop_body
      %s23 = ssub.s32 %s18, 1
      %s24 = ssub.s32 %s18, 2
      %s31 = sadd.s32 1, %s26
      %p32 = scmp.ge.s32.totalorder %s31, 3
      %s33 = scalar_select %p32, 0, %s31
      %s34 = sadd.s32 1, %s25
      %s35 = scalar_select %p32, %s34, %s25
      %p36 = scmp.ge.s32.totalorder %s35, 1
      %s37 = scalar_select %p36, 0, %s35
      %s38 = ssub.s32 %s26, %s33
      %s39 = ssub.s32 %s25, %s37
      %s40 = sor.u32 %s38, %s39
      %p41 = scmp.eq.s32.totalorder %s40, 0
      %s43 = sadd.s32 %s42, 1
      %s44 = scalar_select %p41, %s42, %s43
      %p47 = pneg %p41
      %p48 = scmp.eq.s32.totalorder %s18, 2
      %p49 = por %p47, %p48
      %p50 = scmp.ne.s32.totalorder %s42, %s45
      %p51 = scmp.eq.s32.totalorder %s18, 0
      %p52 = por %p50, %p51
      %p53 = scmp.ne.s32.totalorder %s42, %s45
      %p54 = scmp.eq.s32.totalorder %s23, 2
      %p55 = por %p53, %p54
      %p56 = scmp.ne.s32.totalorder %s45, %s46
      %p57 = scmp.eq.s32.totalorder %s23, 0
      %p58 = por %p56, %p57
      %p59 = scmp.ne.s32.totalorder %s45, %s46
      %p60 = scmp.eq.s32.totalorder %s24, 2
      %p61 = por %p59, %p60
      %p63 = scmp.ne.s32.totalorder %s46, %s62
      %p64 = scmp.eq.s32.totalorder %s24, 0
      %p65 = por %p63, %p64
      %s66 = ssub.s32 %s26, %s33
      %s67 = ssub.s32 %s25, %s37
      %s68 = sor.u32 %s66, %s67
      %p69 = scmp.eq.s32.totalorder %s68, 0
      %s71 = sadd.s32 %s70, 1
      %s72 = scalar_select %p69, %s70, %s71
      %p75 = pneg %p69
      %p76 = scmp.eq.s32.totalorder %s18, 2
      %p77 = por %p75, %p76
      %p78 = scmp.ne.s32.totalorder %s70, %s73
      %p79 = scmp.eq.s32.totalorder %s18, 0
      %p80 = por %p78, %p79
      %p81 = scmp.ne.s32.totalorder %s70, %s73
      %p82 = scmp.eq.s32.totalorder %s23, 2
      %p83 = por %p81, %p82
      %p84 = scmp.ne.s32.totalorder %s73, %s74
      %p85 = scmp.eq.s32.totalorder %s23, 0
      %p86 = por %p84, %p85
      %p87 = scmp.ne.s32.totalorder %s73, %s74
      %p88 = scmp.eq.s32.totalorder %s24, 2
      %p89 = por %p87, %p88
      %p91 = scmp.ne.s32.totalorder %s74, %s90
      %p92 = scmp.eq.s32.totalorder %s24, 0
      %p93 = por %p91, %p92
      %s94 = ssub.s32 %s25, %s37
      %p95 = scmp.eq.s32.totalorder %s94, 0
      %s97 = sadd.s32 %s96, 1
      %s98 = scalar_select %p95, %s96, %s97
      %p101 = pneg %p95
      %p102 = scmp.eq.s32.totalorder %s18, 2
      %p103 = por %p101, %p102
      %p104 = scmp.ne.s32.totalorder %s96, %s99
      %p105 = scmp.eq.s32.totalorder %s18, 0
      %p106 = por %p104, %p105
      %p107 = scmp.ne.s32.totalorder %s96, %s99
      %p108 = scmp.eq.s32.totalorder %s23, 2
      %p109 = por %p107, %p108
      %p110 = scmp.ne.s32.totalorder %s99, %s100
      %p111 = scmp.eq.s32.totalorder %s23, 0
      %p112 = por %p110, %p111
      %p113 = scmp.ne.s32.totalorder %s99, %s100
      %p114 = scmp.eq.s32.totalorder %s24, 2
      %p115 = por %p113, %p114
      %p117 = scmp.ne.s32.totalorder %s100, %s116
      %p118 = scmp.eq.s32.totalorder %s24, 0
      %p119 = por %p117, %p118
      %s120 = ssub.s32 %s25, %s37
      %p121 = scmp.eq.s32.totalorder %s120, 0
      %s123 = sadd.s32 %s122, 1
      %s124 = scalar_select %p121, %s122, %s123
      %p127 = pneg %p121
      %p128 = scmp.eq.s32.totalorder %s18, 2
      %p129 = por %p127, %p128
      %p130 = scmp.ne.s32.totalorder %s122, %s125
      %p131 = scmp.eq.s32.totalorder %s18, 0
      %p132 = por %p130, %p131
      %p133 = scmp.ne.s32.totalorder %s122, %s125
      %p134 = scmp.eq.s32.totalorder %s23, 2
      %p135 = por %p133, %p134
      %p136 = scmp.ne.s32.totalorder %s125, %s126
      %p137 = scmp.eq.s32.totalorder %s23, 0
      %p138 = por %p136, %p137
      %p139 = scmp.ne.s32.totalorder %s125, %s126
      %p140 = scmp.eq.s32.totalorder %s24, 2
      %p141 = por %p139, %p140
      %p143 = scmp.ne.s32.totalorder %s126, %s142
      %p144 = scmp.eq.s32.totalorder %s24, 0
      %p145 = por %p143, %p144
      %p146 = scmp.le.s32.totalorder 1, %s18
      %p147 = scmp.lt.s32.totalorder %s18, 4
      %p148 = pnand %p146, %p147
      %p149 = pneg %p148
      // Predicated region
      $region9: #{tpu_custom_call.1} parent=5 // pred_check
        _
      $region10: #{tpu_custom_call.1} parent=5 // pred_check_branch
        %151 = sbr.rel (%p148) target = $region12
      $region11: #{tpu_custom_call.1} parent=5 // pred_region
        %s152 = ssub.s32 %s18, 1
      $region12: #{tpu_custom_call.1} parent=5 // pred_fallthru
        _
      %p153 = scmp.lt.s32.totalorder %s18, 3
      // Predicated region
      $region13: #{tpu_custom_call.1} parent=5 // pred_check
        %p154 = pneg %p153
      $region14: #{tpu_custom_call.1} parent=5 // pred_check_branch
        %156 = sbr.rel (%p154) target = $region16
      $region15: #{tpu_custom_call.1} parent=5 // pred_region
        // Predicated region
        $region17: #{tpu_custom_call.1} parent=15 // pred_check
          %p157 = pneg %p52
        $region18: #{tpu_custom_call.1} parent=15 // pred_check_branch
          %159 = sbr.rel (%p157) target = $region20
        $region19: #{tpu_custom_call.1} parent=15 // pred_region
          %s160 = sand.u32 %s42, 1
          %s161 = scalar_lea.sflag [#allocation3], %s160
          %s162 = sand.u32 %s42, 1
          %s163 = smul.addr %s162, 512
          %s164 = scalar_lea.vmem [#allocation2], %s163
          %s165 = smul.u32 32, %s26
          %s166 = smul.u32 2, %s25
          %s167 = ssub.s32 75, %s165
          %p168 = scmp.lt.s32.totalorder %s167, 32
          %s169 = scalar_select %p168, %s167, 32
          %s170 = smul.u32 8, %s169
          %s171 = smul.u32 %s170, 2
          %s172 = ssub.s32 512, %s171
          %s173 = sshll.u32 %s172, 4
          %174 = vsyncadd %s161, %s173
          %p175 = scmp.ne.s32.totalorder 0, %s171
          %s176 = smul.addr %s165, 2
          %s177 = sadd.s32 %s166, %s176
          %s178 = smul.addr %s177, 8
          %s179 = scalar_lea.hbm %s0, %s178
          %s180 = smul.u32 16, %s169
          %s181 = sshll.u32 %s179, 4
          %s182 = int_to_ptr.hbm [resolvable:$true] %s181
          %s183 = sshll.u32 %s164, 4
          %s184 = int_to_ptr.vmem [resolvable:$true] %s183
          %s185 = sshll.u32 %s180, 4
          %189 = dma.hbm_to_vmem [thread:$0]  (%p175), %s182, %s185, %s184, %s161, 256, 256, 16
        $region20: #{tpu_custom_call.1} parent=15 // pred_fallthru
          _
        // Predicated region
        $region21: #{tpu_custom_call.1} parent=15 // pred_check
          %p190 = pneg %p80
        $region22: #{tpu_custom_call.1} parent=15 // pred_check_branch
          %192 = sbr.rel (%p190) target = $region24
        $region23: #{tpu_custom_call.1} parent=15 // pred_region
          %s193 = sand.u32 %s70, 1
          %s194 = scalar_lea.sflag [#allocation6], %s193
          %s195 = sand.u32 %s70, 1
          %s196 = smul.addr %s195, 512
          %s197 = scalar_lea.vmem [#allocation5], %s196
          %s198 = smul.u32 32, %s26
          %s199 = smul.u32 2, %s25
          %s200 = ssub.s32 75, %s198
          %p201 = scmp.lt.s32.totalorder %s200, 32
          %s202 = scalar_select %p201, %s200, 32
          %s203 = smul.u32 8, %s202
          %s204 = smul.u32 %s203, 2
          %s205 = ssub.s32 512, %s204
          %s206 = sshll.u32 %s205, 4
          %207 = vsyncadd %s194, %s206
          %p208 = scmp.ne.s32.totalorder 0, %s204
          %s209 = smul.addr %s198, 2
          %s210 = sadd.s32 %s199, %s209
          %s211 = smul.addr %s210, 8
          %s212 = scalar_lea.hbm %s1, %s211
          %s213 = smul.u32 16, %s202
          %s214 = sshll.u32 %s212, 4
          %s215 = int_to_ptr.hbm [resolvable:$true] %s214
          %s216 = sshll.u32 %s197, 4
          %s217 = int_to_ptr.vmem [resolvable:$true] %s216
          %s218 = sshll.u32 %s213, 4
          %222 = dma.hbm_to_vmem [thread:$0]  (%p208), %s215, %s218, %s217, %s194, 256, 256, 16
        $region24: #{tpu_custom_call.1} parent=15 // pred_fallthru
          _
      $region16: #{tpu_custom_call.1} parent=5 // pred_fallthru
        _
      %p223 = scmp.le.s32.totalorder 1, %s18
      %p224 = scmp.lt.s32.totalorder %s18, 4
      %p225 = pnand %p223, %p224
      %p226 = pneg %p225
      // Predicated region
      $region25: #{tpu_custom_call.1} parent=5 // pred_check
        _
      $region26: #{tpu_custom_call.1} parent=5 // pred_check_branch
        %228 = sbr.rel (%p225) target = $region28
      $region27: #{tpu_custom_call.1} parent=5 // pred_region
        %s229 = ssub.s32 %s18, 1
        %s230 = sand.u32 %s45, 1
        %s231 = scalar_lea.sflag [#allocation3], %s230
        %s232 = sand.u32 %s45, 1
        %s233 = smul.addr %s232, 512
        %s234 = scalar_lea.vmem [#allocation2], %s233
        // Predicated region
        $region29: #{tpu_custom_call.1} parent=27 // pred_check
          %p235 = pneg %p58
        $region30: #{tpu_custom_call.1} parent=27 // pred_check_branch
          %237 = sbr.rel (%p235) target = $region32
        $region31: #{tpu_custom_call.1} parent=27 // pred_region
          %239 = dma.done %s231, 8192
        $region32: #{tpu_custom_call.1} parent=27 // pred_fallthru
          _
        %s240 = sand.u32 %s73, 1
        %s241 = scalar_lea.sflag [#allocation6], %s240
        %s242 = sand.u32 %s73, 1
        %s243 = smul.addr %s242, 512
        %s244 = scalar_lea.vmem [#allocation5], %s243
        // Predicated region
        $region33: #{tpu_custom_call.1} parent=27 // pred_check
          %p245 = pneg %p86
        $region34: #{tpu_custom_call.1} parent=27 // pred_check_branch
          %247 = sbr.rel (%p245) target = $region36
        $region35: #{tpu_custom_call.1} parent=27 // pred_region
          %249 = dma.done %s241, 8192
        $region36: #{tpu_custom_call.1} parent=27 // pred_fallthru
          _
        %s250 = sand.u32 %s45, 1
        %s251 = scalar_lea.sflag [#allocation3], %s250
        %s252 = sand.u32 %s45, 1
        %s253 = smul.addr %s252, 512
        %s254 = scalar_lea.vmem [#allocation2], %s253
        %p255 = pneg %p58
        %p256 = pneg %p55
        %s257 = sand.u32 %s73, 1
        %s258 = scalar_lea.sflag [#allocation6], %s257
        %s259 = sand.u32 %s73, 1
        %s260 = smul.addr %s259, 512
        %s261 = scalar_lea.vmem [#allocation5], %s260
        %p262 = pneg %p86
        %p263 = pneg %p83
        %p264 = pneg %p112
        %p265 = pneg %p109
        %p266 = pneg %p138
        %p267 = pneg %p135
        %s268 = smul.u32 32, %s28
        %s269 = smul.u32 2, %s27
        %s270 = ssub.s32 75, %s268
        %p271 = scmp.lt.s32.totalorder %s270, 32
        %s272 = scalar_select %p271, %s270, 32
        %s273 = smul.u32 8, %s272
        %s274 = smul.u32 %s273, 2
        %s275 = smul.u32 32, %s28
        %s276 = smul.u32 2, %s27
        %s277 = ssub.s32 75, %s275
        %p278 = scmp.lt.s32.totalorder %s277, 32
        %s279 = scalar_select %p278, %s277, 32
        %s280 = smul.u32 8, %s279
        %s281 = smul.u32 %s280, 2
        %s282 = smul.u32 2, %s27
        %s283 = smul.u32 2, %s27
        %p284 = scmp.eq.s32.totalorder %s28, 0
        // Predicated region
        $region37: #{tpu_custom_call.1} parent=27 // pred_check
          %p285 = pneg %p284
        $region38: #{tpu_custom_call.1} parent=27 // pred_check_branch
          %287 = sbr.rel (%p285) target = $region40
        $region39: #{tpu_custom_call.1} parent=27 // pred_region
          %v288 = vlaneseq
          %vm289 = vcmp.ge.s32.totalorder %v288, 0
          %vm290 = vcmp.lt.s32.totalorder %v288, 256
          %vm291 = vmand %vm289, %vm290
          %292 = vst.msk [vmem:[#allocation7] sm:$0x3] %vm291, 0.0
          %293 = vst.msk [vmem:[#allocation8] sm:$0x3] %vm291, 0.0
        $region40: #{tpu_custom_call.1} parent=27 // pred_fallthru
          _
        %v294 = vld [vmem:[%s244] sm:$0xff]
        %v295 = vld [vmem:[%s244 + $0x8] sm:$0xff]
        %v296 = vld [vmem:[%s244 + $0x10] sm:$0xff]
        %v297 = vld [vmem:[%s244 + $0x18] sm:$0xff]
        %v298 = vld [vmem:[%s244 + $0x20] sm:$0xff]
        %v299 = vld [vmem:[%s244 + $0x28] sm:$0xff]
        %v300 = vld [vmem:[%s244 + $0x30] sm:$0xff]
        %v301 = vld [vmem:[%s244 + $0x38] sm:$0xff]
        %v302 = vld [vmem:[%s244 + $0x40] sm:$0xff]
        %v303 = vld [vmem:[%s244 + $0x48] sm:$0xff]
        %v304 = vld [vmem:[%s244 + $0x50] sm:$0xff]
        %v305 = vld [vmem:[%s244 + $0x58] sm:$0xff]
        %v306 = vld [vmem:[%s244 + $0x60] sm:$0xff]
        %v307 = vld [vmem:[%s244 + $0x68] sm:$0xff]
        %v308 = vld [vmem:[%s244 + $0x70] sm:$0xff]
        %v309 = vld [vmem:[%s244 + $0x78] sm:$0xff]
        %v310 = vld [vmem:[%s244 + $0x80] sm:$0xff]
        %v311 = vld [vmem:[%s244 + $0x88] sm:$0xff]
        %v312 = vld [vmem:[%s244 + $0x90] sm:$0xff]
        %v313 = vld [vmem:[%s244 + $0x98] sm:$0xff]
        %v314 = vld [vmem:[%s244 + $0xa0] sm:$0xff]
        %v315 = vld [vmem:[%s244 + $0xa8] sm:$0xff]
        %v316 = vld [vmem:[%s244 + $0xb0] sm:$0xff]
        %v317 = vld [vmem:[%s244 + $0xb8] sm:$0xff]
        %v318 = vld [vmem:[%s244 + $0xc0] sm:$0xff]
        %v319 = vld [vmem:[%s244 + $0xc8] sm:$0xff]
        %v320 = vld [vmem:[%s244 + $0xd0] sm:$0xff]
        %v321 = vld [vmem:[%s244 + $0xd8] sm:$0xff]
        %v322 = vld [vmem:[%s244 + $0xe0] sm:$0xff]
        %v323 = vld [vmem:[%s244 + $0xe8] sm:$0xff]
        %v324 = vld [vmem:[%s244 + $0xf0] sm:$0xff]
        %v325 = vld [vmem:[%s244 + $0xf8] sm:$0xff]
        %v326 = vld [vmem:[%s244 + $0x100] sm:$0xff]
        %v327 = vld [vmem:[%s244 + $0x108] sm:$0xff]
        %v328 = vld [vmem:[%s244 + $0x110] sm:$0xff]
        %v329 = vld [vmem:[%s244 + $0x118] sm:$0xff]
        %v330 = vld [vmem:[%s244 + $0x120] sm:$0xff]
        %v331 = vld [vmem:[%s244 + $0x128] sm:$0xff]
        %v332 = vld [vmem:[%s244 + $0x130] sm:$0xff]
        %v333 = vld [vmem:[%s244 + $0x138] sm:$0xff]
        %v334 = vld [vmem:[%s244 + $0x140] sm:$0xff]
        %v335 = vld [vmem:[%s244 + $0x148] sm:$0xff]
        %v336 = vld [vmem:[%s244 + $0x150] sm:$0xff]
        %v337 = vld [vmem:[%s244 + $0x158] sm:$0xff]
        %v338 = vld [vmem:[%s244 + $0x160] sm:$0xff]
        %v339 = vld [vmem:[%s244 + $0x168] sm:$0xff]
        %v340 = vld [vmem:[%s244 + $0x170] sm:$0xff]
        %v341 = vld [vmem:[%s244 + $0x178] sm:$0xff]
        %v342 = vld [vmem:[%s244 + $0x180] sm:$0xff]
        %v343 = vld [vmem:[%s244 + $0x188] sm:$0xff]
        %v344 = vld [vmem:[%s244 + $0x190] sm:$0xff]
        %v345 = vld [vmem:[%s244 + $0x198] sm:$0xff]
        %v346 = vld [vmem:[%s244 + $0x1a0] sm:$0xff]
        %v347 = vld [vmem:[%s244 + $0x1a8] sm:$0xff]
        %v348 = vld [vmem:[%s244 + $0x1b0] sm:$0xff]
        %v349 = vld [vmem:[%s244 + $0x1b8] sm:$0xff]
        %v350 = vld [vmem:[%s244 + $0x1c0] sm:$0xff]
        %v351 = vld [vmem:[%s244 + $0x1c8] sm:$0xff]
        %v352 = vld [vmem:[%s244 + $0x1d0] sm:$0xff]
        %v353 = vld [vmem:[%s244 + $0x1d8] sm:$0xff]
        %v354 = vld [vmem:[%s244 + $0x1e0] sm:$0xff]
        %v355 = vld [vmem:[%s244 + $0x1e8] sm:$0xff]
        %v356 = vld [vmem:[%s244 + $0x1f0] sm:$0xff]
        %v357 = vld [vmem:[%s244 + $0x1f8] sm:$0xff]
        %v358 = vld [vmem:[%s234] sm:$0xff]
        %v359 = vld [vmem:[%s234 + $0x8] sm:$0xff]
        %v360 = vld [vmem:[%s234 + $0x10] sm:$0xff]
        %v361 = vld [vmem:[%s234 + $0x18] sm:$0xff]
        %v362 = vld [vmem:[%s234 + $0x20] sm:$0xff]
        %v363 = vld [vmem:[%s234 + $0x28] sm:$0xff]
        %v364 = vld [vmem:[%s234 + $0x30] sm:$0xff]
        %v365 = vld [vmem:[%s234 + $0x38] sm:$0xff]
        %v366 = vld [vmem:[%s234 + $0x40] sm:$0xff]
        %v367 = vld [vmem:[%s234 + $0x48] sm:$0xff]
        %v368 = vld [vmem:[%s234 + $0x50] sm:$0xff]
        %v369 = vld [vmem:[%s234 + $0x58] sm:$0xff]
        %v370 = vld [vmem:[%s234 + $0x60] sm:$0xff]
        %v371 = vld [vmem:[%s234 + $0x68] sm:$0xff]
        %v372 = vld [vmem:[%s234 + $0x70] sm:$0xff]
        %v373 = vld [vmem:[%s234 + $0x78] sm:$0xff]
        %v374 = vld [vmem:[%s234 + $0x80] sm:$0xff]
        %v375 = vld [vmem:[%s234 + $0x88] sm:$0xff]
        %v376 = vld [vmem:[%s234 + $0x90] sm:$0xff]
        %v377 = vld [vmem:[%s234 + $0x98] sm:$0xff]
        %v378 = vld [vmem:[%s234 + $0xa0] sm:$0xff]
        %v379 = vld [vmem:[%s234 + $0xa8] sm:$0xff]
        %v380 = vld [vmem:[%s234 + $0xb0] sm:$0xff]
        %v381 = vld [vmem:[%s234 + $0xb8] sm:$0xff]
        %v382 = vld [vmem:[%s234 + $0xc0] sm:$0xff]
        %v383 = vld [vmem:[%s234 + $0xc8] sm:$0xff]
        %v384 = vld [vmem:[%s234 + $0xd0] sm:$0xff]
        %v385 = vld [vmem:[%s234 + $0xd8] sm:$0xff]
        %v386 = vld [vmem:[%s234 + $0xe0] sm:$0xff]
        %v387 = vld [vmem:[%s234 + $0xe8] sm:$0xff]
        %v388 = vld [vmem:[%s234 + $0xf0] sm:$0xff]
        %v389 = vld [vmem:[%s234 + $0xf8] sm:$0xff]
        %v390 = vld [vmem:[%s234 + $0x100] sm:$0xff]
        %v391 = vld [vmem:[%s234 + $0x108] sm:$0xff]
        %v392 = vld [vmem:[%s234 + $0x110] sm:$0xff]
        %v393 = vld [vmem:[%s234 + $0x118] sm:$0xff]
        %v394 = vld [vmem:[%s234 + $0x120] sm:$0xff]
        %v395 = vld [vmem:[%s234 + $0x128] sm:$0xff]
        %v396 = vld [vmem:[%s234 + $0x130] sm:$0xff]
        %v397 = vld [vmem:[%s234 + $0x138] sm:$0xff]
        %v398 = vld [vmem:[%s234 + $0x140] sm:$0xff]
        %v399 = vld [vmem:[%s234 + $0x148] sm:$0xff]
        %v400 = vld [vmem:[%s234 + $0x150] sm:$0xff]
        %v401 = vld [vmem:[%s234 + $0x158] sm:$0xff]
        %v402 = vld [vmem:[%s234 + $0x160] sm:$0xff]
        %v403 = vld [vmem:[%s234 + $0x168] sm:$0xff]
        %v404 = vld [vmem:[%s234 + $0x170] sm:$0xff]
        %v405 = vld [vmem:[%s234 + $0x178] sm:$0xff]
        %v406 = vld [vmem:[%s234 + $0x180] sm:$0xff]
        %v407 = vld [vmem:[%s234 + $0x188] sm:$0xff]
        %v408 = vld [vmem:[%s234 + $0x190] sm:$0xff]
        %v409 = vld [vmem:[%s234 + $0x198] sm:$0xff]
        %v410 = vld [vmem:[%s234 + $0x1a0] sm:$0xff]
        %v411 = vld [vmem:[%s234 + $0x1a8] sm:$0xff]
        %v412 = vld [vmem:[%s234 + $0x1b0] sm:$0xff]
        %v413 = vld [vmem:[%s234 + $0x1b8] sm:$0xff]
        %v414 = vld [vmem:[%s234 + $0x1c0] sm:$0xff]
        %v415 = vld [vmem:[%s234 + $0x1c8] sm:$0xff]
        %v416 = vld [vmem:[%s234 + $0x1d0] sm:$0xff]
        %v417 = vld [vmem:[%s234 + $0x1d8] sm:$0xff]
        %v418 = vld [vmem:[%s234 + $0x1e0] sm:$0xff]
        %v419 = vld [vmem:[%s234 + $0x1e8] sm:$0xff]
        %v420 = vld [vmem:[%s234 + $0x1f0] sm:$0xff]
        %v421 = vld [vmem:[%s234 + $0x1f8] sm:$0xff]
        %vm422 = vcmp.ne.f32.partialorder %v294, %v294
        %vm423 = vcmp.ne.f32.partialorder %v295, %v295
        %vm424 = vcmp.ne.f32.partialorder %v296, %v296
        %vm425 = vcmp.ne.f32.partialorder %v297, %v297
        %vm426 = vcmp.ne.f32.partialorder %v298, %v298
        %vm427 = vcmp.ne.f32.partialorder %v299, %v299
        %vm428 = vcmp.ne.f32.partialorder %v300, %v300
        %vm429 = vcmp.ne.f32.partialorder %v301, %v301
        %vm430 = vcmp.ne.f32.partialorder %v302, %v302
        %vm431 = vcmp.ne.f32.partialorder %v303, %v303
        %vm432 = vcmp.ne.f32.partialorder %v304, %v304
        %vm433 = vcmp.ne.f32.partialorder %v305, %v305
        %vm434 = vcmp.ne.f32.partialorder %v306, %v306
        %vm435 = vcmp.ne.f32.partialorder %v307, %v307
        %vm436 = vcmp.ne.f32.partialorder %v308, %v308
        %vm437 = vcmp.ne.f32.partialorder %v309, %v309
        %vm438 = vcmp.ne.f32.partialorder %v310, %v310
        %vm439 = vcmp.ne.f32.partialorder %v311, %v311
        %vm440 = vcmp.ne.f32.partialorder %v312, %v312
        %vm441 = vcmp.ne.f32.partialorder %v313, %v313
        %vm442 = vcmp.ne.f32.partialorder %v314, %v314
        %vm443 = vcmp.ne.f32.partialorder %v315, %v315
        %vm444 = vcmp.ne.f32.partialorder %v316, %v316
        %vm445 = vcmp.ne.f32.partialorder %v317, %v317
        %vm446 = vcmp.ne.f32.partialorder %v318, %v318
        %vm447 = vcmp.ne.f32.partialorder %v319, %v319
        %vm448 = vcmp.ne.f32.partialorder %v320, %v320
        %vm449 = vcmp.ne.f32.partialorder %v321, %v321
        %vm450 = vcmp.ne.f32.partialorder %v322, %v322
        %vm451 = vcmp.ne.f32.partialorder %v323, %v323
        %vm452 = vcmp.ne.f32.partialorder %v324, %v324
        %vm453 = vcmp.ne.f32.partialorder %v325, %v325
        %vm454 = vcmp.ne.f32.partialorder %v326, %v326
        %vm455 = vcmp.ne.f32.partialorder %v327, %v327
        %vm456 = vcmp.ne.f32.partialorder %v328, %v328
        %vm457 = vcmp.ne.f32.partialorder %v329, %v329
        %vm458 = vcmp.ne.f32.partialorder %v330, %v330
        %vm459 = vcmp.ne.f32.partialorder %v331, %v331
        %vm460 = vcmp.ne.f32.partialorder %v332, %v332
        %vm461 = vcmp.ne.f32.partialorder %v333, %v333
        %vm462 = vcmp.ne.f32.partialorder %v334, %v334
        %vm463 = vcmp.ne.f32.partialorder %v335, %v335
        %vm464 = vcmp.ne.f32.partialorder %v336, %v336
        %vm465 = vcmp.ne.f32.partialorder %v337, %v337
        %vm466 = vcmp.ne.f32.partialorder %v338, %v338
        %vm467 = vcmp.ne.f32.partialorder %v339, %v339
        %vm468 = vcmp.ne.f32.partialorder %v340, %v340
        %vm469 = vcmp.ne.f32.partialorder %v341, %v341
        %vm470 = vcmp.ne.f32.partialorder %v342, %v342
        %vm471 = vcmp.ne.f32.partialorder %v343, %v343
        %vm472 = vcmp.ne.f32.partialorder %v344, %v344
        %vm473 = vcmp.ne.f32.partialorder %v345, %v345
        %vm474 = vcmp.ne.f32.partialorder %v346, %v346
        %vm475 = vcmp.ne.f32.partialorder %v347, %v347
        %vm476 = vcmp.ne.f32.partialorder %v348, %v348
        %vm477 = vcmp.ne.f32.partialorder %v349, %v349
        %vm478 = vcmp.ne.f32.partialorder %v350, %v350
        %vm479 = vcmp.ne.f32.partialorder %v351, %v351
        %vm480 = vcmp.ne.f32.partialorder %v352, %v352
        %vm481 = vcmp.ne.f32.partialorder %v353, %v353
        %vm482 = vcmp.ne.f32.partialorder %v354, %v354
        %vm483 = vcmp.ne.f32.partialorder %v355, %v355
        %vm484 = vcmp.ne.f32.partialorder %v356, %v356
        %vm485 = vcmp.ne.f32.partialorder %v357, %v357
        %vm486 = vmxor %vm422, 1
        %vm487 = vmxor %vm423, 1
        %vm488 = vmxor %vm424, 1
        %vm489 = vmxor %vm425, 1
        %vm490 = vmxor %vm426, 1
        %vm491 = vmxor %vm427, 1
        %vm492 = vmxor %vm428, 1
        %vm493 = vmxor %vm429, 1
        %vm494 = vmxor %vm430, 1
        %vm495 = vmxor %vm431, 1
        %vm496 = vmxor %vm432, 1
        %vm497 = vmxor %vm433, 1
        %vm498 = vmxor %vm434, 1
        %vm499 = vmxor %vm435, 1
        %vm500 = vmxor %vm436, 1
        %vm501 = vmxor %vm437, 1
        %vm502 = vmxor %vm438, 1
        %vm503 = vmxor %vm439, 1
        %vm504 = vmxor %vm440, 1
        %vm505 = vmxor %vm441, 1
        %vm506 = vmxor %vm442, 1
        %vm507 = vmxor %vm443, 1
        %vm508 = vmxor %vm444, 1
        %vm509 = vmxor %vm445, 1
        %vm510 = vmxor %vm446, 1
        %vm511 = vmxor %vm447, 1
        %vm512 = vmxor %vm448, 1
        %vm513 = vmxor %vm449, 1
        %vm514 = vmxor %vm450, 1
        %vm515 = vmxor %vm451, 1
        %vm516 = vmxor %vm452, 1
        %vm517 = vmxor %vm453, 1
        %vm518 = vmxor %vm454, 1
        %vm519 = vmxor %vm455, 1
        %vm520 = vmxor %vm456, 1
        %vm521 = vmxor %vm457, 1
        %vm522 = vmxor %vm458, 1
        %vm523 = vmxor %vm459, 1
        %vm524 = vmxor %vm460, 1
        %vm525 = vmxor %vm461, 1
        %vm526 = vmxor %vm462, 1
        %vm527 = vmxor %vm463, 1
        %vm528 = vmxor %vm464, 1
        %vm529 = vmxor %vm465, 1
        %vm530 = vmxor %vm466, 1
        %vm531 = vmxor %vm467, 1
        %vm532 = vmxor %vm468, 1
        %vm533 = vmxor %vm469, 1
        %vm534 = vmxor %vm470, 1
        %vm535 = vmxor %vm471, 1
        %vm536 = vmxor %vm472, 1
        %vm537 = vmxor %vm473, 1
        %vm538 = vmxor %vm474, 1
        %vm539 = vmxor %vm475, 1
        %vm540 = vmxor %vm476, 1
        %vm541 = vmxor %vm477, 1
        %vm542 = vmxor %vm478, 1
        %vm543 = vmxor %vm479, 1
        %vm544 = vmxor %vm480, 1
        %vm545 = vmxor %vm481, 1
        %vm546 = vmxor %vm482, 1
        %vm547 = vmxor %vm483, 1
        %vm548 = vmxor %vm484, 1
        %vm549 = vmxor %vm485, 1
        %v550 = vlaneseq
        %v551 = vshrl.u32 %v550, 7
        %v552 = vadd.s32 %v551, 8
        %v553 = vadd.s32 %v551, 16
        %v554 = vadd.s32 %v551, 24
        %v555 = vadd.s32 %v551, 32
        %v556 = vadd.s32 %v551, 40
        %v557 = vadd.s32 %v551, 48
        %v558 = vadd.s32 %v551, 56
        %v559 = vadd.s32 %v551, 64
        %v560 = vadd.s32 %v551, 72
        %v561 = vadd.s32 %v551, 80
        %v562 = vadd.s32 %v551, 88
        %v563 = vadd.s32 %v551, 96
        %v564 = vadd.s32 %v551, 104
        %v565 = vadd.s32 %v551, 112
        %v566 = vadd.s32 %v551, 120
        %v567 = vadd.s32 %v551, 128
        %v568 = vadd.s32 %v551, 136
        %v569 = vadd.s32 %v551, 144
        %v570 = vadd.s32 %v551, 152
        %v571 = vadd.s32 %v551, 160
        %v572 = vadd.s32 %v551, 168
        %v573 = vadd.s32 %v551, 176
        %v574 = vadd.s32 %v551, 184
        %v575 = vadd.s32 %v551, 192
        %v576 = vadd.s32 %v551, 200
        %v577 = vadd.s32 %v551, 208
        %v578 = vadd.s32 %v551, 216
        %v579 = vadd.s32 %v551, 224
        %v580 = vadd.s32 %v551, 232
        %v581 = vadd.s32 %v551, 240
        %v582 = vadd.s32 %v551, 248
        %s583 = smul.u32 %s28, 256
        %v584 = vstv %s583
        %v585 = vadd.s32 %v551, %v584
        %v586 = vadd.s32 %v552, %v584
        %v587 = vadd.s32 %v553, %v584
        %v588 = vadd.s32 %v554, %v584
        %v589 = vadd.s32 %v555, %v584
        %v590 = vadd.s32 %v556, %v584
        %v591 = vadd.s32 %v557, %v584
        %v592 = vadd.s32 %v558, %v584
        %v593 = vadd.s32 %v559, %v584
        %v594 = vadd.s32 %v560, %v584
        %v595 = vadd.s32 %v561, %v584
        %v596 = vadd.s32 %v562, %v584
        %v597 = vadd.s32 %v563, %v584
        %v598 = vadd.s32 %v564, %v584
        %v599 = vadd.s32 %v565, %v584
        %v600 = vadd.s32 %v566, %v584
        %v601 = vadd.s32 %v567, %v584
        %v602 = vadd.s32 %v568, %v584
        %v603 = vadd.s32 %v569, %v584
        %v604 = vadd.s32 %v570, %v584
        %v605 = vadd.s32 %v571, %v584
        %v606 = vadd.s32 %v572, %v584
        %v607 = vadd.s32 %v573, %v584
        %v608 = vadd.s32 %v574, %v584
        %v609 = vadd.s32 %v575, %v584
        %v610 = vadd.s32 %v576, %v584
        %v611 = vadd.s32 %v577, %v584
        %v612 = vadd.s32 %v578, %v584
        %v613 = vadd.s32 %v579, %v584
        %v614 = vadd.s32 %v580, %v584
        %v615 = vadd.s32 %v581, %v584
        %v616 = vadd.s32 %v582, %v584
        %vm617 = vcmp.lt.s32.totalorder %v585, 600
        %vm618 = vcmp.lt.s32.totalorder %v586, 600
        %vm619 = vcmp.lt.s32.totalorder %v587, 600
        %vm620 = vcmp.lt.s32.totalorder %v588, 600
        %vm621 = vcmp.lt.s32.totalorder %v589, 600
        %vm622 = vcmp.lt.s32.totalorder %v590, 600
        %vm623 = vcmp.lt.s32.totalorder %v591, 600
        %vm624 = vcmp.lt.s32.totalorder %v592, 600
        %vm625 = vcmp.lt.s32.totalorder %v593, 600
        %vm626 = vcmp.lt.s32.totalorder %v594, 600
        %vm627 = vcmp.lt.s32.totalorder %v595, 600
        %vm628 = vcmp.lt.s32.totalorder %v596, 600
        %vm629 = vcmp.lt.s32.totalorder %v597, 600
        %vm630 = vcmp.lt.s32.totalorder %v598, 600
        %vm631 = vcmp.lt.s32.totalorder %v599, 600
        %vm632 = vcmp.lt.s32.totalorder %v600, 600
        %vm633 = vcmp.lt.s32.totalorder %v601, 600
        %vm634 = vcmp.lt.s32.totalorder %v602, 600
        %vm635 = vcmp.lt.s32.totalorder %v603, 600
        %vm636 = vcmp.lt.s32.totalorder %v604, 600
        %vm637 = vcmp.lt.s32.totalorder %v605, 600
        %vm638 = vcmp.lt.s32.totalorder %v606, 600
        %vm639 = vcmp.lt.s32.totalorder %v607, 600
        %vm640 = vcmp.lt.s32.totalorder %v608, 600
        %vm641 = vcmp.lt.s32.totalorder %v609, 600
        %vm642 = vcmp.lt.s32.totalorder %v610, 600
        %vm643 = vcmp.lt.s32.totalorder %v611, 600
        %vm644 = vcmp.lt.s32.totalorder %v612, 600
        %vm645 = vcmp.lt.s32.totalorder %v613, 600
        %vm646 = vcmp.lt.s32.totalorder %v614, 600
        %vm647 = vcmp.lt.s32.totalorder %v615, 600
        %vm648 = vcmp.lt.s32.totalorder %v616, 600
        %vm649 = vmand %vm486, %vm617
        %vm650 = vmand %vm487, %vm617
        %vm651 = vmand %vm488, %vm618
        %vm652 = vmand %vm489, %vm618
        %vm653 = vmand %vm490, %vm619
        %vm654 = vmand %vm491, %vm619
        %vm655 = vmand %vm492, %vm620
        %vm656 = vmand %vm493, %vm620
        %vm657 = vmand %vm494, %vm621
        %vm658 = vmand %vm495, %vm621
        %vm659 = vmand %vm496, %vm622
        %vm660 = vmand %vm497, %vm622
        %vm661 = vmand %vm498, %vm623
        %vm662 = vmand %vm499, %vm623
        %vm663 = vmand %vm500, %vm624
        %vm664 = vmand %vm501, %vm624
        %vm665 = vmand %vm502, %vm625
        %vm666 = vmand %vm503, %vm625
        %vm667 = vmand %vm504, %vm626
        %vm668 = vmand %vm505, %vm626
        %vm669 = vmand %vm506, %vm627
        %vm670 = vmand %vm507, %vm627
        %vm671 = vmand %vm508, %vm628
        %vm672 = vmand %vm509, %vm628
        %vm673 = vmand %vm510, %vm629
        %vm674 = vmand %vm511, %vm629
        %vm675 = vmand %vm512, %vm630
        %vm676 = vmand %vm513, %vm630
        %vm677 = vmand %vm514, %vm631
        %vm678 = vmand %vm515, %vm631
        %vm679 = vmand %vm516, %vm632
        %vm680 = vmand %vm517, %vm632
        %vm681 = vmand %vm518, %vm633
        %vm682 = vmand %vm519, %vm633
        %vm683 = vmand %vm520, %vm634
        %vm684 = vmand %vm521, %vm634
        %vm685 = vmand %vm522, %vm635
        %vm686 = vmand %vm523, %vm635
        %vm687 = vmand %vm524, %vm636
        %vm688 = vmand %vm525, %vm636
        %vm689 = vmand %vm526, %vm637
        %vm690 = vmand %vm527, %vm637
        %vm691 = vmand %vm528, %vm638
        %vm692 = vmand %vm529, %vm638
        %vm693 = vmand %vm530, %vm639
        %vm694 = vmand %vm531, %vm639
        %vm695 = vmand %vm532, %vm640
        %vm696 = vmand %vm533, %vm640
        %vm697 = vmand %vm534, %vm641
        %vm698 = vmand %vm535, %vm641
        %vm699 = vmand %vm536, %vm642
        %vm700 = vmand %vm537, %vm642
        %vm701 = vmand %vm538, %vm643
        %vm702 = vmand %vm539, %vm643
        %vm703 = vmand %vm540, %vm644
        %vm704 = vmand %vm541, %vm644
        %vm705 = vmand %vm542, %vm645
        %vm706 = vmand %vm543, %vm645
        %vm707 = vmand %vm544, %vm646
        %vm708 = vmand %vm545, %vm646
        %vm709 = vmand %vm546, %vm647
        %vm710 = vmand %vm547, %vm647
        %vm711 = vmand %vm548, %vm648
        %vm712 = vmand %vm549, %vm648
        %v713 = vsub.f32 %v294, %v358
        %v714 = vsub.f32 %v295, %v359
        %v715 = vsub.f32 %v296, %v360
        %v716 = vsub.f32 %v297, %v361
        %v717 = vsub.f32 %v298, %v362
        %v718 = vsub.f32 %v299, %v363
        %v719 = vsub.f32 %v300, %v364
        %v720 = vsub.f32 %v301, %v365
        %v721 = vsub.f32 %v302, %v366
        %v722 = vsub.f32 %v303, %v367
        %v723 = vsub.f32 %v304, %v368
        %v724 = vsub.f32 %v305, %v369
        %v725 = vsub.f32 %v306, %v370
        %v726 = vsub.f32 %v307, %v371
        %v727 = vsub.f32 %v308, %v372
        %v728 = vsub.f32 %v309, %v373
        %v729 = vsub.f32 %v310, %v374
        %v730 = vsub.f32 %v311, %v375
        %v731 = vsub.f32 %v312, %v376
        %v732 = vsub.f32 %v313, %v377
        %v733 = vsub.f32 %v314, %v378
        %v734 = vsub.f32 %v315, %v379
        %v735 = vsub.f32 %v316, %v380
        %v736 = vsub.f32 %v317, %v381
        %v737 = vsub.f32 %v318, %v382
        %v738 = vsub.f32 %v319, %v383
        %v739 = vsub.f32 %v320, %v384
        %v740 = vsub.f32 %v321, %v385
        %v741 = vsub.f32 %v322, %v386
        %v742 = vsub.f32 %v323, %v387
        %v743 = vsub.f32 %v324, %v388
        %v744 = vsub.f32 %v325, %v389
        %v745 = vsub.f32 %v326, %v390
        %v746 = vsub.f32 %v327, %v391
        %v747 = vsub.f32 %v328, %v392
        %v748 = vsub.f32 %v329, %v393
        %v749 = vsub.f32 %v330, %v394
        %v750 = vsub.f32 %v331, %v395
        %v751 = vsub.f32 %v332, %v396
        %v752 = vsub.f32 %v333, %v397
        %v753 = vsub.f32 %v334, %v398
        %v754 = vsub.f32 %v335, %v399
        %v755 = vsub.f32 %v336, %v400
        %v756 = vsub.f32 %v337, %v401
        %v757 = vsub.f32 %v338, %v402
        %v758 = vsub.f32 %v339, %v403
        %v759 = vsub.f32 %v340, %v404
        %v760 = vsub.f32 %v341, %v405
        %v761 = vsub.f32 %v342, %v406
        %v762 = vsub.f32 %v343, %v407
        %v763 = vsub.f32 %v344, %v408
        %v764 = vsub.f32 %v345, %v409
        %v765 = vsub.f32 %v346, %v410
        %v766 = vsub.f32 %v347, %v411
        %v767 = vsub.f32 %v348, %v412
        %v768 = vsub.f32 %v349, %v413
        %v769 = vsub.f32 %v350, %v414
        %v770 = vsub.f32 %v351, %v415
        %v771 = vsub.f32 %v352, %v416
        %v772 = vsub.f32 %v353, %v417
        %v773 = vsub.f32 %v354, %v418
        %v774 = vsub.f32 %v355, %v419
        %v775 = vsub.f32 %v356, %v420
        %v776 = vsub.f32 %v357, %v421
        %v777 = vsel %vm649, %v713, 0.0
        %v778 = vsel %vm650, %v714, 0.0
        %v779 = vsel %vm651, %v715, 0.0
        %v780 = vsel %vm652, %v716, 0.0
        %v781 = vsel %vm653, %v717, 0.0
        %v782 = vsel %vm654, %v718, 0.0
        %v783 = vsel %vm655, %v719, 0.0
        %v784 = vsel %vm656, %v720, 0.0
        %v785 = vsel %vm657, %v721, 0.0
        %v786 = vsel %vm658, %v722, 0.0
        %v787 = vsel %vm659, %v723, 0.0
        %v788 = vsel %vm660, %v724, 0.0
        %v789 = vsel %vm661, %v725, 0.0
        %v790 = vsel %vm662, %v726, 0.0
        %v791 = vsel %vm663, %v727, 0.0
        %v792 = vsel %vm664, %v728, 0.0
        %v793 = vsel %vm665, %v729, 0.0
        %v794 = vsel %vm666, %v730, 0.0
        %v795 = vsel %vm667, %v731, 0.0
        %v796 = vsel %vm668, %v732, 0.0
        %v797 = vsel %vm669, %v733, 0.0
        %v798 = vsel %vm670, %v734, 0.0
        %v799 = vsel %vm671, %v735, 0.0
        %v800 = vsel %vm672, %v736, 0.0
        %v801 = vsel %vm673, %v737, 0.0
        %v802 = vsel %vm674, %v738, 0.0
        %v803 = vsel %vm675, %v739, 0.0
        %v804 = vsel %vm676, %v740, 0.0
        %v805 = vsel %vm677, %v741, 0.0
        %v806 = vsel %vm678, %v742, 0.0
        %v807 = vsel %vm679, %v743, 0.0
        %v808 = vsel %vm680, %v744, 0.0
        %v809 = vsel %vm681, %v745, 0.0
        %v810 = vsel %vm682, %v746, 0.0
        %v811 = vsel %vm683, %v747, 0.0
        %v812 = vsel %vm684, %v748, 0.0
        %v813 = vsel %vm685, %v749, 0.0
        %v814 = vsel %vm686, %v750, 0.0
        %v815 = vsel %vm687, %v751, 0.0
        %v816 = vsel %vm688, %v752, 0.0
        %v817 = vsel %vm689, %v753, 0.0
        %v818 = vsel %vm690, %v754, 0.0
        %v819 = vsel %vm691, %v755, 0.0
        %v820 = vsel %vm692, %v756, 0.0
        %v821 = vsel %vm693, %v757, 0.0
        %v822 = vsel %vm694, %v758, 0.0
        %v823 = vsel %vm695, %v759, 0.0
        %v824 = vsel %vm696, %v760, 0.0
        %v825 = vsel %vm697, %v761, 0.0
        %v826 = vsel %vm698, %v762, 0.0
        %v827 = vsel %vm699, %v763, 0.0
        %v828 = vsel %vm700, %v764, 0.0
        %v829 = vsel %vm701, %v765, 0.0
        %v830 = vsel %vm702, %v766, 0.0
        %v831 = vsel %vm703, %v767, 0.0
        %v832 = vsel %vm704, %v768, 0.0
        %v833 = vsel %vm705, %v769, 0.0
        %v834 = vsel %vm706, %v770, 0.0
        %v835 = vsel %vm707, %v771, 0.0
        %v836 = vsel %vm708, %v772, 0.0
        %v837 = vsel %vm709, %v773, 0.0
        %v838 = vsel %vm710, %v774, 0.0
        %v839 = vsel %vm711, %v775, 0.0
        %v840 = vsel %vm712, %v776, 0.0
        %v841 = vld [vmem:[#allocation8] sm:$0x3]
        %v842 = vsel %vm649, 1.0, 0.0
        %v843 = vsel %vm650, 1.0, 0.0
        %v844 = vsel %vm651, 1.0, 0.0
        %v845 = vsel %vm652, 1.0, 0.0
        %v846 = vsel %vm653, 1.0, 0.0
        %v847 = vsel %vm654, 1.0, 0.0
        %v848 = vsel %vm655, 1.0, 0.0
        %v849 = vsel %vm656, 1.0, 0.0
        %v850 = vsel %vm657, 1.0, 0.0
        %v851 = vsel %vm658, 1.0, 0.0
        %v852 = vsel %vm659, 1.0, 0.0
        %v853 = vsel %vm660, 1.0, 0.0
        %v854 = vsel %vm661, 1.0, 0.0
        %v855 = vsel %vm662, 1.0, 0.0
        %v856 = vsel %vm663, 1.0, 0.0
        %v857 = vsel %vm664, 1.0, 0.0
        %v858 = vsel %vm665, 1.0, 0.0
        %v859 = vsel %vm666, 1.0, 0.0
        %v860 = vsel %vm667, 1.0, 0.0
        %v861 = vsel %vm668, 1.0, 0.0
        %v862 = vsel %vm669, 1.0, 0.0
        %v863 = vsel %vm670, 1.0, 0.0
        %v864 = vsel %vm671, 1.0, 0.0
        %v865 = vsel %vm672, 1.0, 0.0
        %v866 = vsel %vm673, 1.0, 0.0
        %v867 = vsel %vm674, 1.0, 0.0
        %v868 = vsel %vm675, 1.0, 0.0
        %v869 = vsel %vm676, 1.0, 0.0
        %v870 = vsel %vm677, 1.0, 0.0
        %v871 = vsel %vm678, 1.0, 0.0
        %v872 = vsel %vm679, 1.0, 0.0
        %v873 = vsel %vm680, 1.0, 0.0
        %v874 = vsel %vm681, 1.0, 0.0
        %v875 = vsel %vm682, 1.0, 0.0
        %v876 = vsel %vm683, 1.0, 0.0
        %v877 = vsel %vm684, 1.0, 0.0
        %v878 = vsel %vm685, 1.0, 0.0
        %v879 = vsel %vm686, 1.0, 0.0
        %v880 = vsel %vm687, 1.0, 0.0
        %v881 = vsel %vm688, 1.0, 0.0
        %v882 = vsel %vm689, 1.0, 0.0
        %v883 = vsel %vm690, 1.0, 0.0
        %v884 = vsel %vm691, 1.0, 0.0
        %v885 = vsel %vm692, 1.0, 0.0
        %v886 = vsel %vm693, 1.0, 0.0
        %v887 = vsel %vm694, 1.0, 0.0
        %v888 = vsel %vm695, 1.0, 0.0
        %v889 = vsel %vm696, 1.0, 0.0
        %v890 = vsel %vm697, 1.0, 0.0
        %v891 = vsel %vm698, 1.0, 0.0
        %v892 = vsel %vm699, 1.0, 0.0
        %v893 = vsel %vm700, 1.0, 0.0
        %v894 = vsel %vm701, 1.0, 0.0
        %v895 = vsel %vm702, 1.0, 0.0
        %v896 = vsel %vm703, 1.0, 0.0
        %v897 = vsel %vm704, 1.0, 0.0
        %v898 = vsel %vm705, 1.0, 0.0
        %v899 = vsel %vm706, 1.0, 0.0
        %v900 = vsel %vm707, 1.0, 0.0
        %v901 = vsel %vm708, 1.0, 0.0
        %v902 = vsel %vm709, 1.0, 0.0
        %v903 = vsel %vm710, 1.0, 0.0
        %v904 = vsel %vm711, 1.0, 0.0
        %v905 = vsel %vm712, 1.0, 0.0
        %v906 = vadd.f32 %v842, %v844
        %v907 = vadd.f32 %v906, %v846
        %v908 = vadd.f32 %v907, %v848
        %v909 = vadd.f32 %v908, %v850
        %v910 = vadd.f32 %v909, %v852
        %v911 = vadd.f32 %v910, %v854
        %v912 = vadd.f32 %v911, %v856
        %v913 = vadd.f32 %v912, %v858
        %v914 = vadd.f32 %v913, %v860
        %v915 = vadd.f32 %v914, %v862
        %v916 = vadd.f32 %v915, %v864
        %v917 = vadd.f32 %v916, %v866
        %v918 = vadd.f32 %v917, %v868
        %v919 = vadd.f32 %v918, %v870
        %v920 = vadd.f32 %v919, %v872
        %v921 = vadd.f32 %v920, %v874
        %v922 = vadd.f32 %v921, %v876
        %v923 = vadd.f32 %v922, %v878
        %v924 = vadd.f32 %v923, %v880
        %v925 = vadd.f32 %v924, %v882
        %v926 = vadd.f32 %v925, %v884
        %v927 = vadd.f32 %v926, %v886
        %v928 = vadd.f32 %v927, %v888
        %v929 = vadd.f32 %v928, %v890
        %v930 = vadd.f32 %v929, %v892
        %v931 = vadd.f32 %v930, %v894
        %v932 = vadd.f32 %v931, %v896
        %v933 = vadd.f32 %v932, %v898
        %v934 = vadd.f32 %v933, %v900
        %v935 = vadd.f32 %v934, %v902
        %v936 = vadd.f32 %v935, %v904
        %v937 = vrot.slane %v936, 4
        %v938 = vadd.f32 %v936, %v937
        %v939 = vrot.slane %v938, 2
        %v940 = vadd.f32 %v938, %v939
        %v941 = vrot.slane %v940, 1
        %v942 = vadd.f32 %v940, %v941
        %v943 = vadd.f32 %v843, %v845
        %v944 = vadd.f32 %v943, %v847
        %v945 = vadd.f32 %v944, %v849
        %v946 = vadd.f32 %v945, %v851
        %v947 = vadd.f32 %v946, %v853
        %v948 = vadd.f32 %v947, %v855
        %v949 = vadd.f32 %v948, %v857
        %v950 = vadd.f32 %v949, %v859
        %v951 = vadd.f32 %v950, %v861
        %v952 = vadd.f32 %v951, %v863
        %v953 = vadd.f32 %v952, %v865
        %v954 = vadd.f32 %v953, %v867
        %v955 = vadd.f32 %v954, %v869
        %v956 = vadd.f32 %v955, %v871
        %v957 = vadd.f32 %v956, %v873
        %v958 = vadd.f32 %v957, %v875
        %v959 = vadd.f32 %v958, %v877
        %v960 = vadd.f32 %v959, %v879
        %v961 = vadd.f32 %v960, %v881
        %v962 = vadd.f32 %v961, %v883
        %v963 = vadd.f32 %v962, %v885
        %v964 = vadd.f32 %v963, %v887
        %v965 = vadd.f32 %v964, %v889
        %v966 = vadd.f32 %v965, %v891
        %v967 = vadd.f32 %v966, %v893
        %v968 = vadd.f32 %v967, %v895
        %v969 = vadd.f32 %v968, %v897
        %v970 = vadd.f32 %v969, %v899
        %v971 = vadd.f32 %v970, %v901
        %v972 = vadd.f32 %v971, %v903
        %v973 = vadd.f32 %v972, %v905
        %v974 = vrot.slane %v973, 4
        %v975 = vadd.f32 %v973, %v974
        %v976 = vrot.slane %v975, 2
        %v977 = vadd.f32 %v975, %v976
        %v978 = vrot.slane %v977, 1
        %v979 = vadd.f32 %v977, %v978
        %v982 = vrot.slane %v979, 7
        %vm983 = vcmask 1040384
        %v984 = vsel %vm983, %v942, %v982
        %v986 = vadd.f32 %v841, %v984
        %v987 = vlaneseq
        %vm988 = vcmp.ge.s32.totalorder %v987, 0
        %vm989 = vcmp.lt.s32.totalorder %v987, 256
        %vm990 = vmand %vm988, %vm989
        %991 = vst.msk [vmem:[#allocation8] sm:$0x3] %vm990, %v986
        %v992 = vld [vmem:[#allocation7] sm:$0x3]
        %v993 = vmul.f32 %v777, %v777
        %v994 = vmul.f32 %v778, %v778
        %v995 = vmul.f32 %v779, %v779
        %v996 = vmul.f32 %v780, %v780
        %v997 = vmul.f32 %v781, %v781
        %v998 = vmul.f32 %v782, %v782
        %v999 = vmul.f32 %v783, %v783
        %v1000 = vmul.f32 %v784, %v784
        %v1001 = vmul.f32 %v785, %v785
        %v1002 = vmul.f32 %v786, %v786
        %v1003 = vmul.f32 %v787, %v787
        %v1004 = vmul.f32 %v788, %v788
        %v1005 = vmul.f32 %v789, %v789
        %v1006 = vmul.f32 %v790, %v790
        %v1007 = vmul.f32 %v791, %v791
        %v1008 = vmul.f32 %v792, %v792
        %v1009 = vmul.f32 %v793, %v793
        %v1010 = vmul.f32 %v794, %v794
        %v1011 = vmul.f32 %v795, %v795
        %v1012 = vmul.f32 %v796, %v796
        %v1013 = vmul.f32 %v797, %v797
        %v1014 = vmul.f32 %v798, %v798
        %v1015 = vmul.f32 %v799, %v799
        %v1016 = vmul.f32 %v800, %v800
        %v1017 = vmul.f32 %v801, %v801
        %v1018 = vmul.f32 %v802, %v802
        %v1019 = vmul.f32 %v803, %v803
        %v1020 = vmul.f32 %v804, %v804
        %v1021 = vmul.f32 %v805, %v805
        %v1022 = vmul.f32 %v806, %v806
        %v1023 = vmul.f32 %v807, %v807
        %v1024 = vmul.f32 %v808, %v808
        %v1025 = vmul.f32 %v809, %v809
        %v1026 = vmul.f32 %v810, %v810
        %v1027 = vmul.f32 %v811, %v811
        %v1028 = vmul.f32 %v812, %v812
        %v1029 = vmul.f32 %v813, %v813
        %v1030 = vmul.f32 %v814, %v814
        %v1031 = vmul.f32 %v815, %v815
        %v1032 = vmul.f32 %v816, %v816
        %v1033 = vmul.f32 %v817, %v817
        %v1034 = vmul.f32 %v818, %v818
        %v1035 = vmul.f32 %v819, %v819
        %v1036 = vmul.f32 %v820, %v820
        %v1037 = vmul.f32 %v821, %v821
        %v1038 = vmul.f32 %v822, %v822
        %v1039 = vmul.f32 %v823, %v823
        %v1040 = vmul.f32 %v824, %v824
        %v1041 = vmul.f32 %v825, %v825
        %v1042 = vmul.f32 %v826, %v826
        %v1043 = vmul.f32 %v827, %v827
        %v1044 = vmul.f32 %v828, %v828
        %v1045 = vmul.f32 %v829, %v829
        %v1046 = vmul.f32 %v830, %v830
        %v1047 = vmul.f32 %v831, %v831
        %v1048 = vmul.f32 %v832, %v832
        %v1049 = vmul.f32 %v833, %v833
        %v1050 = vmul.f32 %v834, %v834
        %v1051 = vmul.f32 %v835, %v835
        %v1052 = vmul.f32 %v836, %v836
        %v1053 = vmul.f32 %v837, %v837
        %v1054 = vmul.f32 %v838, %v838
        %v1055 = vmul.f32 %v839, %v839
        %v1056 = vmul.f32 %v840, %v840
        %v1057 = vadd.f32 %v993, %v995
        %v1058 = vadd.f32 %v1057, %v997
        %v1059 = vadd.f32 %v1058, %v999
        %v1060 = vadd.f32 %v1059, %v1001
        %v1061 = vadd.f32 %v1060, %v1003
        %v1062 = vadd.f32 %v1061, %v1005
        %v1063 = vadd.f32 %v1062, %v1007
        %v1064 = vadd.f32 %v1063, %v1009
        %v1065 = vadd.f32 %v1064, %v1011
        %v1066 = vadd.f32 %v1065, %v1013
        %v1067 = vadd.f32 %v1066, %v1015
        %v1068 = vadd.f32 %v1067, %v1017
        %v1069 = vadd.f32 %v1068, %v1019
        %v1070 = vadd.f32 %v1069, %v1021
        %v1071 = vadd.f32 %v1070, %v1023
        %v1072 = vadd.f32 %v1071, %v1025
        %v1073 = vadd.f32 %v1072, %v1027
        %v1074 = vadd.f32 %v1073, %v1029
        %v1075 = vadd.f32 %v1074, %v1031
        %v1076 = vadd.f32 %v1075, %v1033
        %v1077 = vadd.f32 %v1076, %v1035
        %v1078 = vadd.f32 %v1077, %v1037
        %v1079 = vadd.f32 %v1078, %v1039
        %v1080 = vadd.f32 %v1079, %v1041
        %v1081 = vadd.f32 %v1080, %v1043
        %v1082 = vadd.f32 %v1081, %v1045
        %v1083 = vadd.f32 %v1082, %v1047
        %v1084 = vadd.f32 %v1083, %v1049
        %v1085 = vadd.f32 %v1084, %v1051
        %v1086 = vadd.f32 %v1085, %v1053
        %v1087 = vadd.f32 %v1086, %v1055
        %v1088 = vrot.slane %v1087, 4
        %v1089 = vadd.f32 %v1087, %v1088
        %v1090 = vrot.slane %v1089, 2
        %v1091 = vadd.f32 %v1089, %v1090
        %v1092 = vrot.slane %v1091, 1
        %v1093 = vadd.f32 %v1091, %v1092
        %v1094 = vadd.f32 %v994, %v996
        %v1095 = vadd.f32 %v1094, %v998
        %v1096 = vadd.f32 %v1095, %v1000
        %v1097 = vadd.f32 %v1096, %v1002
        %v1098 = vadd.f32 %v1097, %v1004
        %v1099 = vadd.f32 %v1098, %v1006
        %v1100 = vadd.f32 %v1099, %v1008
        %v1101 = vadd.f32 %v1100, %v1010
        %v1102 = vadd.f32 %v1101, %v1012
        %v1103 = vadd.f32 %v1102, %v1014
        %v1104 = vadd.f32 %v1103, %v1016
        %v1105 = vadd.f32 %v1104, %v1018
        %v1106 = vadd.f32 %v1105, %v1020
        %v1107 = vadd.f32 %v1106, %v1022
        %v1108 = vadd.f32 %v1107, %v1024
        %v1109 = vadd.f32 %v1108, %v1026
        %v1110 = vadd.f32 %v1109, %v1028
        %v1111 = vadd.f32 %v1110, %v1030
        %v1112 = vadd.f32 %v1111, %v1032
        %v1113 = vadd.f32 %v1112, %v1034
        %v1114 = vadd.f32 %v1113, %v1036
        %v1115 = vadd.f32 %v1114, %v1038
        %v1116 = vadd.f32 %v1115, %v1040
        %v1117 = vadd.f32 %v1116, %v1042
        %v1118 = vadd.f32 %v1117, %v1044
        %v1119 = vadd.f32 %v1118, %v1046
        %v1120 = vadd.f32 %v1119, %v1048
        %v1121 = vadd.f32 %v1120, %v1050
        %v1122 = vadd.f32 %v1121, %v1052
        %v1123 = vadd.f32 %v1122, %v1054
        %v1124 = vadd.f32 %v1123, %v1056
        %v1125 = vrot.slane %v1124, 4
        %v1126 = vadd.f32 %v1124, %v1125
        %v1127 = vrot.slane %v1126, 2
        %v1128 = vadd.f32 %v1126, %v1127
        %v1129 = vrot.slane %v1128, 1
        %v1130 = vadd.f32 %v1128, %v1129
        %v1133 = vrot.slane %v1130, 7
        %v1134 = vsel %vm983, %v1093, %v1133
        %v1136 = vadd.f32 %v992, %v1134
        %1137 = vst.msk [vmem:[#allocation7] sm:$0x3] %vm990, %v1136
        %p1138 = scmp.eq.s32.totalorder %s28, 2
        // Predicated region
        $region41: #{tpu_custom_call.1} parent=27 // pred_check
          %p1139 = pneg %p1138
        $region42: #{tpu_custom_call.1} parent=27 // pred_check_branch
          %1141 = sbr.rel (%p1139) target = $region44
        $region43: #{tpu_custom_call.1} parent=27 // pred_region
          %v1142 = vld [vmem:[#allocation8] sm:$0x3]
          %v1143 = vld [vmem:[#allocation7] sm:$0x3]
          %vm1144 = vcmp.ne.f32.partialorder %v1142, 0.0
          %v1145 = vsel %vm1144, %v1142, 1.0
          %v1146 = vrcp.pop %v1145
          %v1147 = vmul.f32 %v1145, %v1146
          %v1148 = vsub.f32 1.0, %v1147
          %v1149 = vmul.f32 %v1146, %v1148
          %v1150 = vadd.f32 %v1146, %v1149
          %vm1151 = vweird.f32 %v1145
          %vm1152 = vweird.f32 %v1146
          %vm1153 = vmor %vm1151, %vm1152
          %v1154 = vsel %vm1153, %v1146, %v1150
          %v1155 = vand.u32 2147483647, %v1145
          %vm1156 = vcmp.eq.f32.partialorder %v1155, 8.507059e+37
          %v1157 = vand.u32 %v1145, 2147483648
          %v1158 = vor.u32 1.1754944e-38, %v1157
          %v1159 = vsel %vm1156, %v1158, %v1154
          %v1160 = vmul.f32 %v1143, %v1159
          %v1161 = vsel %vm1144, %v1160, 0.0
          %vm1162 = vcmp.ne.f32.partialorder %v1161, %v1161
          %v1163 = vsel %vm1162, 0.0, %v1161
          %v1164 = vrsqrt.pop %v1163
          %v1165 = vmul.f32 %v1164, %v1163
          %v1166 = vmul.f32 %v1165, %v1164
          %v1167 = vmul.f32 0.5, %v1166
          %v1168 = vsub.f32 1.5, %v1167
          %v1169 = vmul.f32 %v1164, %v1168
          %v1170 = vmul.f32 %v1163, %v1169
          %vm1171 = vcmp.eq.f32.partialorder %v1163, inf
          %v1172 = vsel %vm1171, %v1163, %v1170
          %vm1173 = vcmp.eq.f32.partialorder %v1163, 0.0
          %v1174 = vand.u32 %v1163, 2147483648
          %v1175 = vsel %vm1173, %v1174, %v1172
          %v1176 = vsel %vm1144, %v1175, 0.0
          %1177 = vst.msk [vmem:[#allocation7] sm:$0x3] %vm990, %v1176
          %v1178 = vsel %vm1144, 1, 0
          %v1179 = vcvt.s32.f32 %v1178
          %1180 = vst.msk [vmem:[#allocation8] sm:$0x3] %vm990, %v1179
        $region44: #{tpu_custom_call.1} parent=27 // pred_fallthru
          _
        // Predicated region
        $region45: #{tpu_custom_call.1} parent=27 // pred_check
          %p1181 = pneg %p109
        $region46: #{tpu_custom_call.1} parent=27 // pred_check_branch
          %1183 = sbr.rel (%p1181) target = $region48
        $region47: #{tpu_custom_call.1} parent=27 // pred_region
          %s1184 = smul.u32 2, %s27
          %1186 = vsyncadd [#allocation4], 0
          %s1187 = scalar_lea.hbm %s2, %s1184
          %s1189 = sshll.u32 [#allocation7], 4
          %s1190 = int_to_ptr.vmem [resolvable:$true] %s1189
          %s1191 = sshll.u32 %s1187, 4
          %s1192 = int_to_ptr.hbm [resolvable:$true] %s1191
          %1194 = dma.vmem_to_hbm [thread:$0]  %s1190, 32, %s1192, [#allocation4]
        $region48: #{tpu_custom_call.1} parent=27 // pred_fallthru
          _
        // Predicated region
        $region49: #{tpu_custom_call.1} parent=27 // pred_check
          %p1195 = pneg %p135
        $region50: #{tpu_custom_call.1} parent=27 // pred_check_branch
          %1197 = sbr.rel (%p1195) target = $region52
        $region51: #{tpu_custom_call.1} parent=27 // pred_region
          %s1198 = smul.u32 2, %s27
          %1200 = vsyncadd [#allocation9], 0
          %s1201 = scalar_lea.hbm %s3, %s1198
          %s1203 = sshll.u32 [#allocation8], 4
          %s1204 = int_to_ptr.vmem [resolvable:$true] %s1203
          %s1205 = sshll.u32 %s1201, 4
          %s1206 = int_to_ptr.hbm [resolvable:$true] %s1205
          %1208 = dma.vmem_to_hbm [thread:$0]  %s1204, 32, %s1206, [#allocation9]
        $region52: #{tpu_custom_call.1} parent=27 // pred_fallthru
          _
        // Predicated region
        $region53: #{tpu_custom_call.1} parent=27 // pred_check
          %p1209 = pneg %p109
        $region54: #{tpu_custom_call.1} parent=27 // pred_check_branch
          %1211 = sbr.rel (%p1209) target = $region56
        $region55: #{tpu_custom_call.1} parent=27 // pred_region
          %1213 = dma.done [#allocation4], 32
        $region56: #{tpu_custom_call.1} parent=27 // pred_fallthru
          _
        // Predicated region
        $region57: #{tpu_custom_call.1} parent=27 // pred_check
          %p1214 = pneg %p135
        $region58: #{tpu_custom_call.1} parent=27 // pred_check_branch
          %1216 = sbr.rel (%p1214) target = $region60
        $region59: #{tpu_custom_call.1} parent=27 // pred_region
          %1218 = dma.done [#allocation9], 32
        $region60: #{tpu_custom_call.1} parent=27 // pred_fallthru
          _
      $region28: #{tpu_custom_call.1} parent=5 // pred_fallthru
        _
      %p1219 = scmp.le.s32.totalorder 2, %s18
      // Predicated region
      $region61: #{tpu_custom_call.1} parent=5 // pred_check
        %p1220 = pneg %p1219
      $region62: #{tpu_custom_call.1} parent=5 // pred_check_branch
        %1222 = sbr.rel (%p1220) target = $region64
      $region63: #{tpu_custom_call.1} parent=5 // pred_region
        %s1223 = ssub.s32 %s18, 2
      $region64: #{tpu_custom_call.1} parent=5 // pred_fallthru
        _
    $region6: #{tpu_custom_call.1} parent=1 // loop_footer
      %s22 = sadd.s32 1, %s18
    $region7: #{tpu_custom_call.1} parent=1 // loop_footer_branch
      %17 = sbr.rel target = $region3
    $region8: #{tpu_custom_call.1} parent=1 // loop_exit
      _
    %1224 = vsyncpa [#allocation3], 1
    %s1225 = scalar_lea.sflag [#allocation3], 1
    %1226 = vsyncpa %s1225, 1
    %1227 = vsyncpa [#allocation6], 1
    %s1228 = scalar_lea.sflag [#allocation6], 1
    %1229 = vsyncpa %s1228, 1
    %1230 = vsyncpa [#allocation4], 1
    %s1231 = scalar_lea.sflag [#allocation4], 1
    %1232 = vsyncpa %s1231, 1
    %1233 = vsyncpa [#allocation9], 1

</llo_original>
